<compile_context>
chip_gen: v7x
topology: tpu7x:2x2x1
jax: 0.10.0
libtpu: 0.0.40
codegen_flags: <defaults>
</compile_context>

<pallas_src>
import functools

import jax
import jax.numpy as jnp
from jax import lax
from jax.experimental import pallas as pl
from jax.experimental.pallas import tpu as pltpu


def conv2d_kernel(x_ref, w_ref, b_ref, o_ref, xp_ref, *,
                  cin, hw, kh, kw, w_img, oh, ow, m_gemm):
    """One grid step == B_BLK images.

    x_ref : (B_BLK, Cin, H*W)        f32  raw flattened NCHW images
    w_ref : (Cout, KH*KW*CIN_PAD)    f32  resident across the grid
    b_ref : (Cout, 1)                f32  resident across the grid
    o_ref : (B_BLK, Cout, OH*OW)     f32  final NCHW-ordered output block
    xp_ref: (B_BLK, CIN_PAD, P_PAD)  f32  VMEM scratch (zero-padded input copy)
    """
    n_blk = o_ref.shape[0]
    n_out = oh * ow

    # --- zero-pad the input in VMEM (channels cin -> CIN_PAD, lanes HW -> P_PAD)
    xp_ref[...] = jnp.zeros_like(xp_ref)
    xp_ref[:, :cin, :hw] = x_ref[...]

    w_mat = w_ref[...]                      # (Cout, K_PAD)  resident
    b_col = b_ref[...]                      # (Cout, 1)      resident

    # --- 0/1 placement matrix: wide column r*W + c -> compact column r*OW + c.
    # Built from 2-D iotas with exact small-integer arithmetic in f32 and applied
    # on the MXU, so the junk columns of the wide GEMM are dropped in-kernel
    # instead of with a post-kernel HBM slice.  Hoisted out of the image loop.
    src = lax.broadcasted_iota(jnp.int32, (m_gemm, n_out), 0).astype(jnp.float32)
    dst = lax.broadcasted_iota(jnp.int32, (m_gemm, n_out), 1).astype(jnp.float32)
    # floor(dst / ow) without integer division: exact for these small integers.
    row = ((dst + 0.5) * (1.0 / ow)).astype(jnp.int32).astype(jnp.float32)
    sel = src == (dst + row * float(w_img - ow))
    placer = jnp.where(sel, 1.0, 0.0).astype(jnp.float32)      # (M_GEMM, OH*OW)

    for b in range(n_blk):                  # static unroll over this block's images
        xpb = xp_ref[b]                     # (CIN_PAD, P_PAD)
        # In-VMEM im2col: KH*KW shifted views stacked along sublanes.  Each piece
        # is CIN_PAD = 8 rows, so every concat offset is 8-aligned (plain vreg
        # copies, no sublane shuffles).  Row order (i, j, c) matches w_ref columns.
        pieces = [xpb[:, i * w_img + j: i * w_img + j + m_gemm]
                  for i in range(kh) for j in range(kw)]
        patches = jnp.concatenate(pieces, axis=0)               # (K_PAD, M_GEMM)

        # Main conv GEMM with f32 accumulation; M is lane-dense (multiple of 128).
        acc = jnp.dot(w_mat, patches, preferred_element_type=jnp.float32)

        # Drop junk columns + land directly in contiguous NCHW order, then store
        # the full (Cout, OH*OW) block at lane offset 0 (no partial-offset stores).
        compact = jnp.dot(acc, placer, preferred_element_type=jnp.float32) + b_col
        o_ref[b] = compact.astype(o_ref.dtype)


def _pick_batch_block(n):
    """Images per grid step: amortize per-step overhead while keeping >= 2 grid
    steps so v7x's two TensorCores both get work and DMAs double-buffer."""
    for blk in (8, 4, 2, 1):
        if n % blk == 0 and n // blk >= 2:
            return blk
    return n


def my_neural_forward(x_nchw, weight_oihw, bias):
    """Forward pass equivalent to MyNeural.forward: Conv2d(3, 64, k=3), NCHW in/out."""
    N, Cin, H, W = x_nchw.shape
    Cout, _, KH, KW = weight_oihw.shape
    OH, OW = H - KH + 1, W - KW + 1
    HW = H * W

    CIN_PAD = 8                                   # sublane-aligned channel count
    K_PAD = KH * KW * CIN_PAD                     # 72
    M_GEMM = ((OH * W + 127) // 128) * 128        # lane-dense wide-GEMM width (256)
    P_PAD = (KH - 1) * W + (KW - 1) + M_GEMM      # padded flattened spatial extent

    B_BLK = _pick_batch_block(N)
    grid = (N // B_BLK,)

    # Layout glue only: a free bitcast reshape of the input plus a tiny weight /
    # bias repack.  No image-sized pad / cast / im2col / output-slice in HBM.
    x_flat = x_nchw.reshape(N, Cin, HW).astype(jnp.float32)
    w_t = jnp.transpose(weight_oihw, (0, 2, 3, 1))                  # (O, KH, KW, I)
    w_t = jnp.pad(w_t, ((0, 0), (0, 0), (0, 0), (0, CIN_PAD - Cin)))
    w_t = w_t.reshape(Cout, K_PAD).astype(jnp.float32)
    b_col = bias.reshape(Cout, 1).astype(jnp.float32)

    kernel = functools.partial(conv2d_kernel, cin=Cin, hw=HW, kh=KH, kw=KW,
                               w_img=W, oh=OH, ow=OW, m_gemm=M_GEMM)

    flops = 2 * N * Cout * M_GEMM * (K_PAD + OH * OW)
    bytes_accessed = (x_flat.size * 4 + w_t.size * 4 + b_col.size * 4
                      + N * Cout * OH * OW * 4)

    out_flat = pl.pallas_call(
        kernel,
        out_shape=jax.ShapeDtypeStruct((N, Cout, OH * OW), jnp.float32),
        grid=grid,
        in_specs=[
            pl.BlockSpec((B_BLK, Cin, HW), lambda n: (n, 0, 0)),    # per-step images
            pl.BlockSpec((Cout, K_PAD), lambda n: (0, 0)),          # resident weight
            pl.BlockSpec((Cout, 1), lambda n: (0, 0)),              # resident bias
        ],
        out_specs=pl.BlockSpec((B_BLK, Cout, OH * OW), lambda n: (n, 0, 0)),
        scratch_shapes=[pltpu.VMEM((B_BLK, CIN_PAD, P_PAD), jnp.float32)],
        compiler_params=pltpu.CompilerParams(
            dimension_semantics=("parallel",)),                     # megacore / v7x
        cost_estimate=pl.CostEstimate(flops=flops, transcendentals=0,
                                      bytes_accessed=bytes_accessed),
    )(x_flat, w_t, b_col)

    # Pure bitcast back to NCHW -- no slice, no transpose, no extra HBM traffic.
    return out_flat.reshape(N, Cout, OH, OW)


if __name__ == "__main__":
    key = jax.random.PRNGKey(0)
    kx, kw_, kb = jax.random.split(key, 3)

    # Small shapes consistent with the module: batch=2, in_channels=3, spatial=16.
    N, Cin, H, W = 2, 3, 16, 16
    Cout, KH, KW = 64, 3, 3

    x = jax.random.normal(kx, (N, Cin, H, W), dtype=jnp.float32)
    # Deterministic PyTorch-style init (uniform, bound 1/sqrt(fan_in)).
    fan_in = Cin * KH * KW
    bound = 1.0 / (fan_in ** 0.5)
    weight = jax.random.uniform(kw_, (Cout, Cin, KH, KW), minval=-bound,
                                maxval=bound, dtype=jnp.float32)
    bias = jax.random.uniform(kb, (Cout,), minval=-bound, maxval=bound,
                              dtype=jnp.float32)

    fwd = jax.jit(my_neural_forward)
    out = jax.block_until_ready(fwd(x, weight, bias))

    # Reference check against XLA's f32 conv.
    ref = jax.lax.conv_general_dilated(
        x, weight, window_strides=(1, 1), padding="VALID",
        dimension_numbers=("NCHW", "OIHW", "NCHW"),
        precision=jax.lax.Precision.HIGHEST,
    ) + bias[None, :, None, None]

    assert out.shape == (N, Cout, H - KH + 1, W - KW + 1), out.shape
    max_err = float(jnp.max(jnp.abs(out - ref)))
    assert jnp.allclose(out, ref, atol=1e-2, rtol=1e-2), max_err

    print("KERNEL_OK")
</pallas_src>

<mosaic_0001>
module attributes {stable_mosaic.version = 11 : i64} {
  func.func @conv2d_kernel(%arg0: i32, %arg1: memref<1x3x256xf32, #tpu.memory_space<vmem>>, %arg2: memref<64x72xf32, #tpu.memory_space<vmem>>, %arg3: memref<64x1xf32, #tpu.memory_space<vmem>>, %arg4: memref<1x64x196xf32, #tpu.memory_space<vmem>>, %arg5: memref<1x8x290xf32, #tpu.memory_space<vmem>>) attributes {dimension_semantics = [#tpu.dimension_semantics<parallel>], iteration_bounds = array<i64: 2>, scalar_prefetch = 0 : i64, scratch_operands = 1 : i64, tpu.core_type = #tpu.core_type<tc>, window_params = [{transform_indices = @transform_0, window_bounds = array<i64: 1, 3, 256>}, {pipeline_mode = #tpu.pipeline_mode<synchronous>, transform_indices = @transform_1, window_bounds = array<i64: 64, 72>}, {pipeline_mode = #tpu.pipeline_mode<synchronous>, transform_indices = @transform_2, window_bounds = array<i64: 64, 1>}, {transform_indices = @transform_3, window_bounds = array<i64: 1, 64, 196>}]} {
    %cst = arith.constant 0.000000e+00 : f32
    %0 = vector.broadcast %cst : f32 to vector<1x8x290xf32>
    %c0 = arith.constant 0 : index
    %c0_0 = arith.constant 0 : index
    %c0_1 = arith.constant 0 : index
    %1 = vector.load %arg5[%c0, %c0_0, %c0_1] : memref<1x8x290xf32, #tpu.memory_space<vmem>>, vector<1x8x290xf32>
    tpu.vector_store %arg5[%c0, %c0_0, %c0_1], %0 {strides = array<i32>} : memref<1x8x290xf32, #tpu.memory_space<vmem>>, vector<1x8x290xf32>,
    %c0_2 = arith.constant 0 : index
    %c0_3 = arith.constant 0 : index
    %c0_4 = arith.constant 0 : index
    %2 = vector.load %arg1[%c0_2, %c0_3, %c0_4] : memref<1x3x256xf32, #tpu.memory_space<vmem>>, vector<1x3x256xf32>
    %c0_5 = arith.constant 0 : index
    %c0_6 = arith.constant 0 : index
    %c0_7 = arith.constant 0 : index
    %3 = vector.load %arg5[%c0_5, %c0_6, %c0_7] : memref<1x8x290xf32, #tpu.memory_space<vmem>>, vector<1x3x256xf32>
    tpu.vector_store %arg5[%c0_5, %c0_6, %c0_7], %2 {strides = array<i32>} : memref<1x8x290xf32, #tpu.memory_space<vmem>>, vector<1x3x256xf32>,
    %c0_8 = arith.constant 0 : index
    %c0_9 = arith.constant 0 : index
    %4 = vector.load %arg2[%c0_8, %c0_9] : memref<64x72xf32, #tpu.memory_space<vmem>>, vector<64x72xf32>
    %c0_10 = arith.constant 0 : index
    %c0_11 = arith.constant 0 : index
    %5 = vector.load %arg3[%c0_10, %c0_11] : memref<64x1xf32, #tpu.memory_space<vmem>>, vector<64x1xf32>
    %6 = tpu.iota {dimensions = array<i32: 0>} : vector<256x196xi32>
    %7 = arith.sitofp %6 : vector<256x196xi32> to vector<256x196xf32>
    %8 = tpu.iota {dimensions = array<i32: 1>} : vector<256x196xi32>
    %9 = arith.sitofp %8 : vector<256x196xi32> to vector<256x196xf32>
    %cst_12 = arith.constant 5.000000e-01 : f32
    %10 = vector.broadcast %cst_12 : f32 to vector<256x196xf32>
    %11 = arith.addf %9, %10 : vector<256x196xf32>
    %cst_13 = arith.constant 0.0714285746 : f32
    %12 = vector.broadcast %cst_13 : f32 to vector<256x196xf32>
    %13 = arith.mulf %11, %12 : vector<256x196xf32>
    %14 = arith.fptosi %13 : vector<256x196xf32> to vector<256x196xi32>
    %15 = arith.sitofp %14 : vector<256x196xi32> to vector<256x196xf32>
    %cst_14 = arith.constant 2.000000e+00 : f32
    %16 = vector.broadcast %cst_14 : f32 to vector<256x196xf32>
    %17 = arith.mulf %15, %16 : vector<256x196xf32>
    %18 = arith.addf %9, %17 : vector<256x196xf32>
    %19 = arith.cmpf oeq, %7, %18 : vector<256x196xf32>
    %cst_15 = arith.constant 1.000000e+00 : f32
    %cst_16 = arith.constant 0.000000e+00 : f32
    %20 = vector.broadcast %cst_15 : f32 to vector<256x196xf32>
    %21 = vector.broadcast %cst_16 : f32 to vector<256x196xf32>
    %22 = arith.select %19, %20, %21 : vector<256x196xi1>, vector<256x196xf32>
    %c0_17 = arith.constant 0 : index
    %c0_18 = arith.constant 0 : index
    %c0_19 = arith.constant 0 : index
    %23 = vector.load %arg5[%c0_17, %c0_18, %c0_19] : memref<1x8x290xf32, #tpu.memory_space<vmem>>, vector<1x8x290xf32>
    %24 = vector.shape_cast %23 : vector<1x8x290xf32> to vector<8x290xf32>
    %25 = vector.extract_strided_slice %24 {offsets = [0, 0], sizes = [8, 256], strides = [1, 1]} : vector<8x290xf32> to vector<8x256xf32>
    %26 = vector.extract_strided_slice %24 {offsets = [0, 1], sizes = [8, 256], strides = [1, 1]} : vector<8x290xf32> to vector<8x256xf32>
    %27 = vector.extract_strided_slice %24 {offsets = [0, 2], sizes = [8, 256], strides = [1, 1]} : vector<8x290xf32> to vector<8x256xf32>
    %28 = vector.extract_strided_slice %24 {offsets = [0, 16], sizes = [8, 256], strides = [1, 1]} : vector<8x290xf32> to vector<8x256xf32>
    %29 = vector.extract_strided_slice %24 {offsets = [0, 17], sizes = [8, 256], strides = [1, 1]} : vector<8x290xf32> to vector<8x256xf32>
    %30 = vector.extract_strided_slice %24 {offsets = [0, 18], sizes = [8, 256], strides = [1, 1]} : vector<8x290xf32> to vector<8x256xf32>
    %31 = vector.extract_strided_slice %24 {offsets = [0, 32], sizes = [8, 256], strides = [1, 1]} : vector<8x290xf32> to vector<8x256xf32>
    %32 = vector.extract_strided_slice %24 {offsets = [0, 33], sizes = [8, 256], strides = [1, 1]} : vector<8x290xf32> to vector<8x256xf32>
    %33 = vector.extract_strided_slice %24 {offsets = [0, 34], sizes = [8, 256], strides = [1, 1]} : vector<8x290xf32> to vector<8x256xf32>
    %34 = tpu.concatenate %25, %26, %27, %28, %29, %30, %31, %32, %33 in 0 : vector<8x256xf32>, vector<8x256xf32>, vector<8x256xf32>, vector<8x256xf32>, vector<8x256xf32>, vector<8x256xf32>, vector<8x256xf32>, vector<8x256xf32>, vector<8x256xf32> -> vector<72x256xf32>
    %cst_20 = arith.constant dense<0.000000e+00> : vector<64x256xf32>
    %35 = tpu.matmul %4, %34, %cst_20 {dimension_numbers = #tpu.dot_dimension_numbers<[1], [0], [0], [1], [0, 0, 1, 1], [], []>} : vector<64x72xf32>, vector<72x256xf32>, vector<64x256xf32> -> vector<64x256xf32>
    %cst_21 = arith.constant dense<0.000000e+00> : vector<64x196xf32>
    %36 = tpu.matmul %35, %22, %cst_21 {dimension_numbers = #tpu.dot_dimension_numbers<[1], [0], [0], [1], [0, 0, 1, 1], [], []>} : vector<64x256xf32>, vector<256x196xf32>, vector<64x196xf32> -> vector<64x196xf32>
    %37 = vector.broadcast %5 : vector<64x1xf32> to vector<64x196xf32>
    %38 = arith.addf %36, %37 : vector<64x196xf32>
    %c0_22 = arith.constant 0 : index
    %c0_23 = arith.constant 0 : index
    %c0_24 = arith.constant 0 : index
    %39 = vector.load %arg4[%c0_22, %c0_23, %c0_24] : memref<1x64x196xf32, #tpu.memory_space<vmem>>, vector<1x64x196xf32>
    %40 = vector.shape_cast %39 : vector<1x64x196xf32> to vector<64x196xf32>
    %41 = vector.shape_cast %38 : vector<64x196xf32> to vector<1x64x196xf32>
    tpu.vector_store %arg4[%c0_22, %c0_23, %c0_24], %41 {strides = array<i32>} : memref<1x64x196xf32, #tpu.memory_space<vmem>>, vector<1x64x196xf32>,
    return
  }
  func.func @transform_0(%arg0: i32) -> (i32, i32, i32) {
    %c0_i32 = arith.constant 0 : i32
    %c0_i32_0 = arith.constant 0 : i32
    %c0_i32_1 = arith.constant 0 : i32
    return %arg0, %c0_i32, %c0_i32_0 : i32, i32, i32
  }
  func.func @transform_1(%arg0: i32) -> (i32, i32) {
    %c0_i32 = arith.constant 0 : i32
    %c0_i32_0 = arith.constant 0 : i32
    %c0_i32_1 = arith.constant 0 : i32
    return %c0_i32, %c0_i32_0 : i32, i32
  }
  func.func @transform_2(%arg0: i32) -> (i32, i32) {
    %c0_i32 = arith.constant 0 : i32
    %c0_i32_0 = arith.constant 0 : i32
    %c0_i32_1 = arith.constant 0 : i32
    return %c0_i32, %c0_i32_0 : i32, i32
  }
  func.func @transform_3(%arg0: i32) -> (i32, i32, i32) {
    %c0_i32 = arith.constant 0 : i32
    %c0_i32_0 = arith.constant 0 : i32
    %c0_i32_1 = arith.constant 0 : i32
    return %arg0, %c0_i32, %c0_i32_0 : i32, i32, i32
  }
}

</mosaic_0001>

<llo_original>
// kernel: my_neural_forward.1
$region0: #{my_neural_forward.1}
  #allocation0 [shape = 'u32[]', space=smem, size = 0x4, offset = 0x4, fixed_abs, tag = 'smem constant byte address 0x4 - core index']
  #allocation1 [shape = 'u32[144,128]{1,0:T(1,128)}', space=vmem, size = 0x12000, scoped, tag = 'internal scratch']
  #allocation2 [shape = 'f32[1,8,290]{2,1,0:T(8,128)}', space=vmem, size = 0x3000, scoped, tag = 'scratch operand']
  %s0 = inlined_call_operand.vmem [shape: f32[2,3,256], index: 0, kind: input, shape index: {}]
  %s1 = inlined_call_operand.vmem [shape: f32[64,72], index: 1, kind: input, shape index: {}]
  %s2 = inlined_call_operand.vmem [shape: f32[64,1], index: 2, kind: input, shape index: {}]
  %s3 = inlined_call_operand.vmem [shape: f32[2,64,196], index: 3, kind: output, shape index: {}]
  %s4 = sld [smem:[#allocation0]]
  $region45: #{my_neural_forward.1} parent=0
    _
  %s6 = ssub.s32 1, %s4
  %s7 = scalar_select 0, %s6, %s4
  loop: start=0, step=1, limit=4
  $region2: #{my_neural_forward.1} parent=0 // loop_pre_header
    _
  $region3: #{my_neural_forward.1} parent=0 // loop_header
    %s9 = sphi 0, %s13
    %p10 = scmp.ge.s32.totalorder %s9, 4
    %s19 = sphi 0, %s21
    %s22 = sphi 0, %s19
    %s23 = sphi 0, %s22
    %s39 = sphi 0, %s23
    %s43 = sphi 0, %s43
    %s45 = sphi 0, %s43
    %s46 = sphi 0, %s45
    %s60 = sphi 0, %s46
    %s64 = sphi 0, %s64
    %s66 = sphi 0, %s64
    %s67 = sphi 0, %s66
    %s81 = sphi 0, %s67
    %s87 = sphi 0, %s89
    %s90 = sphi 0, %s87
    %s91 = sphi 0, %s90
    %s107 = sphi 0, %s91
  $region4: #{my_neural_forward.1} parent=0 // loop_header_branch
    %12 = sbr.rel (%p10) target = $region8
  $region5: #{my_neural_forward.1} parent=0 // loop_body
    %s14 = ssub.s32 %s9, 1
    %s15 = ssub.s32 %s9, 2
    %s16 = sadd.s32 %s9, 1
    %s17 = ssub.s32 %s9, %s16
    %p18 = scmp.eq.s32.totalorder %s17, 0
    %s20 = sadd.s32 %s19, 1
    %s21 = scalar_select %p18, %s19, %s20
    %p24 = pneg %p18
    %p25 = scmp.eq.s32.totalorder %s9, 1
    %p26 = por %p24, %p25
    %p27 = scmp.ne.s32.totalorder %s19, %s22
    %p28 = scmp.eq.s32.totalorder %s9, 0
    %p29 = por %p27, %p28
    %p30 = scmp.ne.s32.totalorder %s19, %s22
    %p31 = scmp.eq.s32.totalorder %s14, 1
    %p32 = por %p30, %p31
    %p33 = scmp.ne.s32.totalorder %s22, %s23
    %p34 = scmp.eq.s32.totalorder %s14, 0
    %p35 = por %p33, %p34
    %p36 = scmp.ne.s32.totalorder %s22, %s23
    %p37 = scmp.eq.s32.totalorder %s15, 1
    %p38 = por %p36, %p37
    %p40 = scmp.ne.s32.totalorder %s23, %s39
    %p41 = scmp.eq.s32.totalorder %s15, 0
    %p42 = por %p40, %p41
    %s44 = sadd.s32 %s43, 1
    %p47 = scmp.eq.s32.totalorder %s9, 1
    %p48 = scmp.ne.s32.totalorder %s43, %s45
    %p49 = scmp.eq.s32.totalorder %s9, 0
    %p50 = por %p48, %p49
    %p51 = scmp.ne.s32.totalorder %s43, %s45
    %p52 = scmp.eq.s32.totalorder %s14, 1
    %p53 = por %p51, %p52
    %p54 = scmp.ne.s32.totalorder %s45, %s46
    %p55 = scmp.eq.s32.totalorder %s14, 0
    %p56 = por %p54, %p55
    %p57 = scmp.ne.s32.totalorder %s45, %s46
    %p58 = scmp.eq.s32.totalorder %s15, 1
    %p59 = por %p57, %p58
    %p61 = scmp.ne.s32.totalorder %s46, %s60
    %p62 = scmp.eq.s32.totalorder %s15, 0
    %p63 = por %p61, %p62
    %s65 = sadd.s32 %s64, 1
    %p68 = scmp.eq.s32.totalorder %s9, 1
    %p69 = scmp.ne.s32.totalorder %s64, %s66
    %p70 = scmp.eq.s32.totalorder %s9, 0
    %p71 = por %p69, %p70
    %p72 = scmp.ne.s32.totalorder %s64, %s66
    %p73 = scmp.eq.s32.totalorder %s14, 1
    %p74 = por %p72, %p73
    %p75 = scmp.ne.s32.totalorder %s66, %s67
    %p76 = scmp.eq.s32.totalorder %s14, 0
    %p77 = por %p75, %p76
    %p78 = scmp.ne.s32.totalorder %s66, %s67
    %p79 = scmp.eq.s32.totalorder %s15, 1
    %p80 = por %p78, %p79
    %p82 = scmp.ne.s32.totalorder %s67, %s81
    %p83 = scmp.eq.s32.totalorder %s15, 0
    %p84 = por %p82, %p83
    %s85 = ssub.s32 %s9, %s16
    %p86 = scmp.eq.s32.totalorder %s85, 0
    %s88 = sadd.s32 %s87, 1
    %s89 = scalar_select %p86, %s87, %s88
    %p92 = pneg %p86
    %p93 = scmp.eq.s32.totalorder %s9, 1
    %p94 = por %p92, %p93
    %p95 = scmp.ne.s32.totalorder %s87, %s90
    %p96 = scmp.eq.s32.totalorder %s9, 0
    %p97 = por %p95, %p96
    %p98 = scmp.ne.s32.totalorder %s87, %s90
    %p99 = scmp.eq.s32.totalorder %s14, 1
    %p100 = por %p98, %p99
    %p101 = scmp.ne.s32.totalorder %s90, %s91
    %p102 = scmp.eq.s32.totalorder %s14, 0
    %p103 = por %p101, %p102
    %p104 = scmp.ne.s32.totalorder %s90, %s91
    %p105 = scmp.eq.s32.totalorder %s15, 1
    %p106 = por %p104, %p105
    %p108 = scmp.ne.s32.totalorder %s91, %s107
    %p109 = scmp.eq.s32.totalorder %s15, 0
    %p110 = por %p108, %p109
    %p111 = scmp.le.s32.totalorder 1, %s9
    %p112 = scmp.lt.s32.totalorder %s9, 3
    %p113 = pnand %p111, %p112
    %p114 = pneg %p113
    // Predicated region
    $region9: #{my_neural_forward.1} parent=5 // pred_check
      _
    $region10: #{my_neural_forward.1} parent=5 // pred_check_branch
      %116 = sbr.rel (%p113) target = $region12
    $region11: #{my_neural_forward.1} parent=5 // pred_region
      %s117 = ssub.s32 %s9, 1
      // Predicated region
      $region13: #{my_neural_forward.1} parent=11 // pred_check
        %p118 = pneg %p56
      $region14: #{my_neural_forward.1} parent=11 // pred_check_branch
        %120 = sbr.rel (%p118) target = $region16
      $region15: #{my_neural_forward.1} parent=11 // pred_region
        _
      $region16: #{my_neural_forward.1} parent=11 // pred_fallthru
        _
      // Predicated region
      $region17: #{my_neural_forward.1} parent=11 // pred_check
        %p121 = pneg %p77
      $region18: #{my_neural_forward.1} parent=11 // pred_check_branch
        %123 = sbr.rel (%p121) target = $region20
      $region19: #{my_neural_forward.1} parent=11 // pred_region
        _
      $region20: #{my_neural_forward.1} parent=11 // pred_fallthru
        _
    $region12: #{my_neural_forward.1} parent=5 // pred_fallthru
      _
    %p124 = scmp.lt.s32.totalorder %s9, 2
    // Predicated region
    $region21: #{my_neural_forward.1} parent=5 // pred_check
      %p125 = pneg %p124
    $region22: #{my_neural_forward.1} parent=5 // pred_check_branch
      %127 = sbr.rel (%p125) target = $region24
    $region23: #{my_neural_forward.1} parent=5 // pred_region
      // Predicated region
      $region25: #{my_neural_forward.1} parent=23 // pred_check
        %p128 = pneg %p29
      $region26: #{my_neural_forward.1} parent=23 // pred_check_branch
        %130 = sbr.rel (%p128) target = $region28
      $region27: #{my_neural_forward.1} parent=23 // pred_region
        %p131 = scmp.lt.s32.totalorder %s9, 1
        %s132 = scalar_select %p131, %s9, 1
        %s133 = smul.addr %s132, 2
        %s134 = smul.addr %s133, 4
        %s135 = scalar_lea.vmem %s0, %s134
      $region28: #{my_neural_forward.1} parent=23 // pred_fallthru
        _
    $region24: #{my_neural_forward.1} parent=5 // pred_fallthru
      _
    %p136 = scmp.le.s32.totalorder 1, %s9
    %p137 = scmp.lt.s32.totalorder %s9, 3
    %p138 = pnand %p136, %p137
    %p139 = pneg %p138
    // Predicated region
    $region29: #{my_neural_forward.1} parent=5 // pred_check
      _
    $region30: #{my_neural_forward.1} parent=5 // pred_check_branch
      %141 = sbr.rel (%p138) target = $region32
    $region31: #{my_neural_forward.1} parent=5 // pred_region
      %s142 = ssub.s32 %s9, 1
      %p143 = scmp.lt.s32.totalorder %s14, 1
      %s144 = scalar_select %p143, %s14, 1
      %s145 = smul.addr %s144, 2
      %s146 = smul.addr %s145, 4
      %s147 = scalar_lea.vmem %s0, %s146
      %p148 = pneg %p35
      %p149 = pneg %p32
      %p150 = pneg %p56
      %p151 = pneg %p53
      %p152 = pneg %p77
      %p153 = pneg %p74
      %p154 = pneg %p103
      %p155 = pneg %p100
      %p156 = scmp.lt.s32.totalorder %s14, 1
      %s157 = scalar_select %p156, %s14, 1
      %s158 = smul.addr %s157, 16
      %s159 = smul.addr %s158, 8
      %s160 = scalar_lea.vmem %s3, %s159
      %p161 = scmp.lt.s32.totalorder %s14, 1
      %s162 = scalar_select %p161, %s14, 1
      %s163 = smul.addr %s162, 2
      %s164 = smul.addr %s163, 4
      %s165 = scalar_lea.vmem %s0, %s164
      %p166 = scmp.lt.s32.totalorder %s14, 1
      %s167 = scalar_select %p166, %s14, 1
      %s168 = smul.addr %s167, 16
      %s169 = smul.addr %s168, 8
      %s170 = scalar_lea.vmem %s3, %s169
      %171 = vst [vmem:[#allocation2] sm:$0xff] 0.0
      %172 = vst [vmem:[#allocation2 + $0x8] sm:$0xff] 0.0
      %vm173 = vcmask 277504
      %174 = vst.msk [vmem:[#allocation2 + $0x10] sm:$0xff] %vm173, 0.0
      %v175 = vld [vmem:[%s165] sm:$0x77]
      %v177 = vcombine.high %v175, %v175
      %179 = vst [vmem:[#allocation2] sm:$0x7] %v175
      %180 = vst [vmem:[#allocation2 + $0x8] sm:$0x7] %v177
      %v181 = vld [vmem:[%s1] sm:$0xff]
      %v182 = vld [vmem:[%s1 + $0x8] sm:$0xff]
      %v183 = vld [vmem:[%s1 + $0x10] sm:$0xff]
      %v184 = vld [vmem:[%s1 + $0x18] sm:$0xff]
      %v185 = vld [vmem:[%s1 + $0x20] sm:$0xff]
      %v186 = vld [vmem:[%s1 + $0x28] sm:$0xff]
      %v187 = vld [vmem:[%s1 + $0x30] sm:$0xff]
      %v188 = vld [vmem:[%s1 + $0x38] sm:$0xff]
      %v189 = vld [vmem:[%s2] sm:$0xff]
      %v190 = vld [vmem:[%s2 + $0x8] sm:$0xff]
      %v191 = vld [vmem:[%s2 + $0x10] sm:$0xff]
      %v192 = vld [vmem:[%s2 + $0x18] sm:$0xff]
      %v193 = vld [vmem:[%s2 + $0x20] sm:$0xff]
      %v194 = vld [vmem:[%s2 + $0x28] sm:$0xff]
      %v195 = vld [vmem:[%s2 + $0x30] sm:$0xff]
      %v196 = vld [vmem:[%s2 + $0x38] sm:$0xff]
      %v197 = vlaneseq
      %v198 = vshrl.u32 %v197, 7
      %v199 = vadd.s32 %v198, 8
      %v200 = vadd.s32 %v198, 16
      %v201 = vadd.s32 %v198, 24
      %v202 = vadd.s32 %v198, 32
      %v203 = vadd.s32 %v198, 40
      %v204 = vadd.s32 %v198, 48
      %v205 = vadd.s32 %v198, 56
      %v206 = vadd.s32 %v198, 64
      %v207 = vadd.s32 %v198, 72
      %v208 = vadd.s32 %v198, 80
      %v209 = vadd.s32 %v198, 88
      %v210 = vadd.s32 %v198, 96
      %v211 = vadd.s32 %v198, 104
      %v212 = vadd.s32 %v198, 112
      %v213 = vadd.s32 %v198, 120
      %v214 = vadd.s32 %v198, 128
      %v215 = vadd.s32 %v198, 136
      %v216 = vadd.s32 %v198, 144
      %v217 = vadd.s32 %v198, 152
      %v218 = vadd.s32 %v198, 160
      %v219 = vadd.s32 %v198, 168
      %v220 = vadd.s32 %v198, 176
      %v221 = vadd.s32 %v198, 184
      %v222 = vadd.s32 %v198, 192
      %v223 = vadd.s32 %v198, 200
      %v224 = vadd.s32 %v198, 208
      %v225 = vadd.s32 %v198, 216
      %v226 = vadd.s32 %v198, 224
      %v227 = vadd.s32 %v198, 232
      %v228 = vadd.s32 %v198, 240
      %v229 = vadd.s32 %v198, 248
      %v230 = vcvt.s32.f32 %v198
      %v231 = vcvt.s32.f32 %v199
      %v232 = vcvt.s32.f32 %v200
      %v233 = vcvt.s32.f32 %v201
      %v234 = vcvt.s32.f32 %v202
      %v235 = vcvt.s32.f32 %v203
      %v236 = vcvt.s32.f32 %v204
      %v237 = vcvt.s32.f32 %v205
      %v238 = vcvt.s32.f32 %v206
      %v239 = vcvt.s32.f32 %v207
      %v240 = vcvt.s32.f32 %v208
      %v241 = vcvt.s32.f32 %v209
      %v242 = vcvt.s32.f32 %v210
      %v243 = vcvt.s32.f32 %v211
      %v244 = vcvt.s32.f32 %v212
      %v245 = vcvt.s32.f32 %v213
      %v246 = vcvt.s32.f32 %v214
      %v247 = vcvt.s32.f32 %v215
      %v248 = vcvt.s32.f32 %v216
      %v249 = vcvt.s32.f32 %v217
      %v250 = vcvt.s32.f32 %v218
      %v251 = vcvt.s32.f32 %v219
      %v252 = vcvt.s32.f32 %v220
      %v253 = vcvt.s32.f32 %v221
      %v254 = vcvt.s32.f32 %v222
      %v255 = vcvt.s32.f32 %v223
      %v256 = vcvt.s32.f32 %v224
      %v257 = vcvt.s32.f32 %v225
      %v258 = vcvt.s32.f32 %v226
      %v259 = vcvt.s32.f32 %v227
      %v260 = vcvt.s32.f32 %v228
      %v261 = vcvt.s32.f32 %v229
      %v262 = vlaneseq
      %v263 = vand.u32 %v262, 127
      %v264 = vadd.s32 %v263, 128
      %v265 = vcvt.s32.f32 %v263
      %v266 = vcvt.s32.f32 %v264
      %v267 = vadd.f32 %v265, 0.5
      %v268 = vadd.f32 %v266, 0.5
      %v269 = vmul.f32 %v267, 0.071428575
      %v270 = vmul.f32 %v268, 0.071428575
      %v271 = vcvt.f32.s32.to.zero.pseudo %v269
      %v272 = vcvt.f32.s32.to.zero.pseudo %v270
      %v273 = vcvt.s32.f32 %v271
      %v274 = vcvt.s32.f32 %v272
      %v275 = vmul.f32 %v273, 2.0
      %v276 = vmul.f32 %v274, 2.0
      %v277 = vadd.f32 %v265, %v275
      %v278 = vadd.f32 %v266, %v276
      %vm279 = vcmp.eq.f32.partialorder %v230, %v277
      %vm280 = vcmp.eq.f32.partialorder %v230, %v278
      %vm281 = vcmp.eq.f32.partialorder %v231, %v277
      %vm282 = vcmp.eq.f32.partialorder %v231, %v278
      %vm283 = vcmp.eq.f32.partialorder %v232, %v277
      %vm284 = vcmp.eq.f32.partialorder %v232, %v278
      %vm285 = vcmp.eq.f32.partialorder %v233, %v277
      %vm286 = vcmp.eq.f32.partialorder %v233, %v278
      %vm287 = vcmp.eq.f32.partialorder %v234, %v277
      %vm288 = vcmp.eq.f32.partialorder %v234, %v278
      %vm289 = vcmp.eq.f32.partialorder %v235, %v277
      %vm290 = vcmp.eq.f32.partialorder %v235, %v278
      %vm291 = vcmp.eq.f32.partialorder %v236, %v277
      %vm292 = vcmp.eq.f32.partialorder %v236, %v278
      %vm293 = vcmp.eq.f32.partialorder %v237, %v277
      %vm294 = vcmp.eq.f32.partialorder %v237, %v278
      %vm295 = vcmp.eq.f32.partialorder %v238, %v277
      %vm296 = vcmp.eq.f32.partialorder %v238, %v278
      %vm297 = vcmp.eq.f32.partialorder %v239, %v277
      %vm298 = vcmp.eq.f32.partialorder %v239, %v278
      %vm299 = vcmp.eq.f32.partialorder %v240, %v277
      %vm300 = vcmp.eq.f32.partialorder %v240, %v278
      %vm301 = vcmp.eq.f32.partialorder %v241, %v277
      %vm302 = vcmp.eq.f32.partialorder %v241, %v278
      %vm303 = vcmp.eq.f32.partialorder %v242, %v277
      %vm304 = vcmp.eq.f32.partialorder %v242, %v278
      %vm305 = vcmp.eq.f32.partialorder %v243, %v277
      %vm306 = vcmp.eq.f32.partialorder %v243, %v278
      %vm307 = vcmp.eq.f32.partialorder %v244, %v277
      %vm308 = vcmp.eq.f32.partialorder %v244, %v278
      %vm309 = vcmp.eq.f32.partialorder %v245, %v277
      %vm310 = vcmp.eq.f32.partialorder %v245, %v278
      %vm311 = vcmp.eq.f32.partialorder %v246, %v277
      %vm312 = vcmp.eq.f32.partialorder %v246, %v278
      %vm313 = vcmp.eq.f32.partialorder %v247, %v277
      %vm314 = vcmp.eq.f32.partialorder %v247, %v278
      %vm315 = vcmp.eq.f32.partialorder %v248, %v277
      %vm316 = vcmp.eq.f32.partialorder %v248, %v278
      %vm317 = vcmp.eq.f32.partialorder %v249, %v277
      %vm318 = vcmp.eq.f32.partialorder %v249, %v278
      %vm319 = vcmp.eq.f32.partialorder %v250, %v277
      %vm320 = vcmp.eq.f32.partialorder %v250, %v278
      %vm321 = vcmp.eq.f32.partialorder %v251, %v277
      %vm322 = vcmp.eq.f32.partialorder %v251, %v278
      %vm323 = vcmp.eq.f32.partialorder %v252, %v277
      %vm324 = vcmp.eq.f32.partialorder %v252, %v278
      %vm325 = vcmp.eq.f32.partialorder %v253, %v277
      %vm326 = vcmp.eq.f32.partialorder %v253, %v278
      %vm327 = vcmp.eq.f32.partialorder %v254, %v277
      %vm328 = vcmp.eq.f32.partialorder %v254, %v278
      %vm329 = vcmp.eq.f32.partialorder %v255, %v277
      %vm330 = vcmp.eq.f32.partialorder %v255, %v278
      %vm331 = vcmp.eq.f32.partialorder %v256, %v277
      %vm332 = vcmp.eq.f32.partialorder %v256, %v278
      %vm333 = vcmp.eq.f32.partialorder %v257, %v277
      %vm334 = vcmp.eq.f32.partialorder %v257, %v278
      %vm335 = vcmp.eq.f32.partialorder %v258, %v277
      %vm336 = vcmp.eq.f32.partialorder %v258, %v278
      %vm337 = vcmp.eq.f32.partialorder %v259, %v277
      %vm338 = vcmp.eq.f32.partialorder %v259, %v278
      %vm339 = vcmp.eq.f32.partialorder %v260, %v277
      %vm340 = vcmp.eq.f32.partialorder %v260, %v278
      %vm341 = vcmp.eq.f32.partialorder %v261, %v277
      %vm342 = vcmp.eq.f32.partialorder %v261, %v278
      %v343 = vsel %vm279, 1.0, 0.0
      %v344 = vsel %vm280, 1.0, 0.0
      %v345 = vsel %vm281, 1.0, 0.0
      %v346 = vsel %vm282, 1.0, 0.0
      %v347 = vsel %vm283, 1.0, 0.0
      %v348 = vsel %vm284, 1.0, 0.0
      %v349 = vsel %vm285, 1.0, 0.0
      %v350 = vsel %vm286, 1.0, 0.0
      %v351 = vsel %vm287, 1.0, 0.0
      %v352 = vsel %vm288, 1.0, 0.0
      %v353 = vsel %vm289, 1.0, 0.0
      %v354 = vsel %vm290, 1.0, 0.0
      %v355 = vsel %vm291, 1.0, 0.0
      %v356 = vsel %vm292, 1.0, 0.0
      %v357 = vsel %vm293, 1.0, 0.0
      %v358 = vsel %vm294, 1.0, 0.0
      %v359 = vsel %vm295, 1.0, 0.0
      %v360 = vsel %vm296, 1.0, 0.0
      %v361 = vsel %vm297, 1.0, 0.0
      %v362 = vsel %vm298, 1.0, 0.0
      %v363 = vsel %vm299, 1.0, 0.0
      %v364 = vsel %vm300, 1.0, 0.0
      %v365 = vsel %vm301, 1.0, 0.0
      %v366 = vsel %vm302, 1.0, 0.0
      %v367 = vsel %vm303, 1.0, 0.0
      %v368 = vsel %vm304, 1.0, 0.0
      %v369 = vsel %vm305, 1.0, 0.0
      %v370 = vsel %vm306, 1.0, 0.0
      %v371 = vsel %vm307, 1.0, 0.0
      %v372 = vsel %vm308, 1.0, 0.0
      %v373 = vsel %vm309, 1.0, 0.0
      %v374 = vsel %vm310, 1.0, 0.0
      %v375 = vsel %vm311, 1.0, 0.0
      %v376 = vsel %vm312, 1.0, 0.0
      %v377 = vsel %vm313, 1.0, 0.0
      %v378 = vsel %vm314, 1.0, 0.0
      %v379 = vsel %vm315, 1.0, 0.0
      %v380 = vsel %vm316, 1.0, 0.0
      %v381 = vsel %vm317, 1.0, 0.0
      %v382 = vsel %vm318, 1.0, 0.0
      %v383 = vsel %vm319, 1.0, 0.0
      %v384 = vsel %vm320, 1.0, 0.0
      %v385 = vsel %vm321, 1.0, 0.0
      %v386 = vsel %vm322, 1.0, 0.0
      %v387 = vsel %vm323, 1.0, 0.0
      %v388 = vsel %vm324, 1.0, 0.0
      %v389 = vsel %vm325, 1.0, 0.0
      %v390 = vsel %vm326, 1.0, 0.0
      %v391 = vsel %vm327, 1.0, 0.0
      %v392 = vsel %vm328, 1.0, 0.0
      %v393 = vsel %vm329, 1.0, 0.0
      %v394 = vsel %vm330, 1.0, 0.0
      %v395 = vsel %vm331, 1.0, 0.0
      %v396 = vsel %vm332, 1.0, 0.0
      %v397 = vsel %vm333, 1.0, 0.0
      %v398 = vsel %vm334, 1.0, 0.0
      %v399 = vsel %vm335, 1.0, 0.0
      %v400 = vsel %vm336, 1.0, 0.0
      %v401 = vsel %vm337, 1.0, 0.0
      %v402 = vsel %vm338, 1.0, 0.0
      %v403 = vsel %vm339, 1.0, 0.0
      %v404 = vsel %vm340, 1.0, 0.0
      %v405 = vsel %vm341, 1.0, 0.0
      %v406 = vsel %vm342, 1.0, 0.0
      %v407 = vld [vmem:[#allocation2] sm:$0xff]
      %v408 = vld [vmem:[#allocation2 + $0x8] sm:$0xff]
      %v409 = vld [vmem:[#allocation2 + $0x10] sm:$0xff]
      %413 = vrot.lane.b32.xlu0 %v407, 127
      %v414 = vpop.permute.xlu0 %413
      %415 = vrot.lane.b32.xlu0 %v408, 127
      %v416 = vpop.permute.xlu0 %415
      %417 = vrot.lane.b32.xlu0 %v409, 127
      %v418 = vpop.permute.xlu0 %417
      %vm419 = vcmask 1039360
      %v420 = vsel %vm419, %v414, %v416
      %v421 = vsel %vm419, %v416, %v418
      %424 = vrot.lane.b32.xlu0 %v407, 126
      %v425 = vpop.permute.xlu0 %424
      %426 = vrot.lane.b32.xlu0 %v408, 126
      %v427 = vpop.permute.xlu0 %426
      %428 = vrot.lane.b32.xlu0 %v409, 126
      %v429 = vpop.permute.xlu0 %428
      %vm430 = vcmask 1031168
      %v431 = vsel %vm430, %v425, %v427
      %v432 = vsel %vm430, %v427, %v429
      %435 = vrot.lane.b32.xlu0 %v407, 112
      %v436 = vpop.permute.xlu0 %435
      %437 = vrot.lane.b32.xlu0 %v408, 112
      %v438 = vpop.permute.xlu0 %437
      %439 = vrot.lane.b32.xlu0 %v409, 112
      %v440 = vpop.permute.xlu0 %439
      %vm441 = vcmask 916480
      %v442 = vsel %vm441, %v436, %v438
      %v443 = vsel %vm441, %v438, %v440
      %446 = vrot.lane.b32.xlu0 %v407, 111
      %v447 = vpop.permute.xlu0 %446
      %448 = vrot.lane.b32.xlu0 %v408, 111
      %v449 = vpop.permute.xlu0 %448
      %450 = vrot.lane.b32.xlu0 %v409, 111
      %v451 = vpop.permute.xlu0 %450
      %vm452 = vcmask 908288
      %v453 = vsel %vm452, %v447, %v449
      %v454 = vsel %vm452, %v449, %v451
      %457 = vrot.lane.b32.xlu0 %v407, 110
      %v458 = vpop.permute.xlu0 %457
      %459 = vrot.lane.b32.xlu0 %v408, 110
      %v460 = vpop.permute.xlu0 %459
      %461 = vrot.lane.b32.xlu0 %v409, 110
      %v462 = vpop.permute.xlu0 %461
      %vm463 = vcmask 900096
      %v464 = vsel %vm463, %v458, %v460
      %v465 = vsel %vm463, %v460, %v462
      %468 = vrot.lane.b32.xlu0 %v407, 96
      %v469 = vpop.permute.xlu0 %468
      %470 = vrot.lane.b32.xlu0 %v408, 96
      %v471 = vpop.permute.xlu0 %470
      %472 = vrot.lane.b32.xlu0 %v409, 96
      %v473 = vpop.permute.xlu0 %472
      %vm474 = vcmask 785408
      %v475 = vsel %vm474, %v469, %v471
      %v476 = vsel %vm474, %v471, %v473
      %479 = vrot.lane.b32.xlu0 %v407, 95
      %v480 = vpop.permute.xlu0 %479
      %481 = vrot.lane.b32.xlu0 %v408, 95
      %v482 = vpop.permute.xlu0 %481
      %483 = vrot.lane.b32.xlu0 %v409, 95
      %v484 = vpop.permute.xlu0 %483
      %vm485 = vcmask 777216
      %v486 = vsel %vm485, %v480, %v482
      %v487 = vsel %vm485, %v482, %v484
      %490 = vrot.lane.b32.xlu0 %v407, 94
      %v491 = vpop.permute.xlu0 %490
      %492 = vrot.lane.b32.xlu0 %v408, 94
      %v493 = vpop.permute.xlu0 %492
      %494 = vrot.lane.b32.xlu0 %v409, 94
      %v495 = vpop.permute.xlu0 %494
      %vm496 = vcmask 769024
      %v497 = vsel %vm496, %v491, %v493
      %v498 = vsel %vm496, %v493, %v495
      %vm501 = vcmask 588800
      %v503 = vsel %vm501, %v181, 0
      %v506 = vsel %vm501, %v182, 0
      %v509 = vsel %vm501, %v183, 0
      %v512 = vsel %vm501, %v184, 0
      %v515 = vsel %vm501, %v185, 0
      %v518 = vsel %vm501, %v186, 0
      %v521 = vsel %vm501, %v187, 0
      %v524 = vsel %vm501, %v188, 0
      %526 = vmatprep.subr.mxu0 %v408
      %527 = vmatpush1.msra.mxu0 %v407
      %528 = vmatprep.subr.mxu0 %v421
      %529 = vmatpush1.msra.mxu0 %v420
      %530 = vmatprep.subr.mxu0 %v432
      %531 = vmatpush1.msra.mxu0 %v431
      %532 = vmatprep.subr.mxu0 %v443
      %533 = vmatpush1.msra.mxu0 %v442
      %534 = vmatprep.subr.mxu0 %v454
      %535 = vmatpush1.msra.mxu0 %v453
      %536 = vmatprep.subr.mxu0 %v465
      %537 = vmatpush1.msra.mxu0 %v464
      %538 = vmatprep.subr.mxu0 %v476
      %539 = vmatpush1.msra.mxu0 %v475
      %540 = vmatprep.subr.mxu0 %v487
      %541 = vmatpush1.msra.mxu0 %v486
      %542 = vmatprep.subr.mxu0 %v498
      %543 = vmatpush1.msra.mxu0 %v497
      %544 = vmatprep.subr.mxu0 0.0
      %545 = vmatpush1.msra.mxu0 0.0
      %546 = vmatprep.subr.mxu0 0.0
      %547 = vmatpush1.msra.mxu0 0.0
      %548 = vmatprep.subr.mxu0 0.0
      %549 = vmatpush1.msra.mxu0 0.0
      %550 = vmatprep.subr.mxu0 0.0
      %551 = vmatpush1.msra.mxu0 0.0
      %552 = vmatprep.subr.mxu0 0.0
      %553 = vmatpush1.msra.mxu0 0.0
      %554 = vmatprep.subr.mxu0 0.0
      %555 = vmatpush1.msra.mxu0 0.0
      %556 = vmatprep.subr.mxu0 0.0
      %557 = vmatpush1.msra.mxu0 0.0
      %558 = vmatprep.subr.mxu0 0.0
      %559 = vmatpush1.msra.mxu0 0.0
      %560 = vmatprep.subr.mxu0 0.0
      %561 = vmatpush1.msra.mxu0 0.0
      %562 = vmatprep.subr.mxu0 0.0
      %563 = vmatpush1.msra.mxu0 0.0
      %564 = vmatprep.subr.mxu0 0.0
      %565 = vmatpush1.msra.mxu0 0.0
      %566 = vmatprep.subr.mxu0 0.0
      %567 = vmatpush1.msra.mxu0 0.0
      %568 = vmatprep.subr.mxu0 0.0
      %569 = vmatpush1.msra.mxu0 0.0
      %570 = vmatprep.subr.mxu0 0.0
      %571 = vmatpush1.msra.mxu0 0.0
      %572 = vmatprep.subr.mxu0 0.0
      %573 = vmatpush1.msra.mxu0 0.0
      %574 = vmatprep.subr.mxu0 0.0
      %575 = vmatpush1.msra.mxu0 0.0
      %576 = vmatprep.subr.mxu0 0.0
      %577 = vmatpush1.msra.mxu0 0.0
      %578 = vmatprep.subr.mxu0 0.0
      %579 = vmatpush1.msra.mxu0 0.0
      %580 = vmatprep.subr.mxu0 0.0
      %581 = vmatpush1.msra.mxu0 0.0
      %582 = vmatprep.subr.mxu0 0.0
      %583 = vmatpush1.msra.mxu0 0.0
      %584 = vmatprep.subr.mxu0 0.0
      %585 = vmatpush1.msra.mxu0 0.0
      %586 = vmatprep.subr.mxu0 0.0
      %587 = vmatpush1.msra.mxu0 0.0
      %588 = vmatprep.subr.mxu0 0.0
      %589 = vmatpush1.msra.mxu0 0.0
      %590 = vmatprep.mubr.f32.mxu0 0.0
      %591 = vmatmul.mubr.f32.gmra.mrb[0].mxu0 %v503
      %v592 = vpop.f32.mrb[0].mxu0
      %v593 = vadd.f32 0.0, %v592
      %v594 = vpop.f32.mrb[0].mxu0
      %v595 = vadd.f32 0.0, %v594
      %596 = vmatprep.mubr.f32.mxu0 0.0
      %597 = vmatmul.mubr.f32.gmra.mrb[0].mxu0 %v506
      %v598 = vpop.f32.mrb[0].mxu0
      %v599 = vadd.f32 0.0, %v598
      %v600 = vpop.f32.mrb[0].mxu0
      %v601 = vadd.f32 0.0, %v600
      %602 = vmatprep.mubr.f32.mxu0 0.0
      %603 = vmatmul.mubr.f32.gmra.mrb[0].mxu0 %v509
      %v604 = vpop.f32.mrb[0].mxu0
      %v605 = vadd.f32 0.0, %v604
      %v606 = vpop.f32.mrb[0].mxu0
      %v607 = vadd.f32 0.0, %v606
      %608 = vmatprep.mubr.f32.mxu0 0.0
      %609 = vmatmul.mubr.f32.gmra.mrb[0].mxu0 %v512
      %v610 = vpop.f32.mrb[0].mxu0
      %v611 = vadd.f32 0.0, %v610
      %v612 = vpop.f32.mrb[0].mxu0
      %v613 = vadd.f32 0.0, %v612
      %614 = vmatprep.mubr.f32.mxu0 0.0
      %615 = vmatmul.mubr.f32.gmra.mrb[0].mxu0 %v515
      %v616 = vpop.f32.mrb[0].mxu0
      %v617 = vadd.f32 0.0, %v616
      %v618 = vpop.f32.mrb[0].mxu0
      %v619 = vadd.f32 0.0, %v618
      %620 = vmatprep.mubr.f32.mxu0 0.0
      %621 = vmatmul.mubr.f32.gmra.mrb[0].mxu0 %v518
      %v622 = vpop.f32.mrb[0].mxu0
      %v623 = vadd.f32 0.0, %v622
      %v624 = vpop.f32.mrb[0].mxu0
      %v625 = vadd.f32 0.0, %v624
      %626 = vmatprep.mubr.f32.mxu0 0.0
      %627 = vmatmul.mubr.f32.gmra.mrb[0].mxu0 %v521
      %v628 = vpop.f32.mrb[0].mxu0
      %v629 = vadd.f32 0.0, %v628
      %v630 = vpop.f32.mrb[0].mxu0
      %v631 = vadd.f32 0.0, %v630
      %632 = vmatprep.mubr.f32.mxu0 0.0
      %633 = vmatmul.mubr.f32.gmra.mrb[0].mxu0 %v524
      %v634 = vpop.f32.mrb[0].mxu0
      %v635 = vadd.f32 0.0, %v634
      %v636 = vpop.f32.mrb[0].mxu0
      %v637 = vadd.f32 0.0, %v636
      %638 = vdwg.mxu0
      %640 = vset.pattern.permute.xlu0 0
      %641 = vperm.xlu0 %640, %v189
      %v642 = vpop.permute.xlu0 %641
      %645 = vset.pattern.permute.xlu0 0
      %646 = vperm.xlu0 %645, %v190
      %v647 = vpop.permute.xlu0 %646
      %650 = vset.pattern.permute.xlu0 0
      %651 = vperm.xlu0 %650, %v191
      %v652 = vpop.permute.xlu0 %651
      %655 = vset.pattern.permute.xlu0 0
      %656 = vperm.xlu0 %655, %v192
      %v657 = vpop.permute.xlu0 %656
      %660 = vset.pattern.permute.xlu0 0
      %661 = vperm.xlu0 %660, %v193
      %v662 = vpop.permute.xlu0 %661
      %665 = vset.pattern.permute.xlu0 0
      %666 = vperm.xlu0 %665, %v194
      %v667 = vpop.permute.xlu0 %666
      %670 = vset.pattern.permute.xlu0 0
      %671 = vperm.xlu0 %670, %v195
      %v672 = vpop.permute.xlu0 %671
      %675 = vset.pattern.permute.xlu0 0
      %676 = vperm.xlu0 %675, %v196
      %v677 = vpop.permute.xlu0 %676
      %679 = vmatprep.subr.mxu0 %v344
      %680 = vmatpush1.msra.mxu0 %v343
      %681 = vmatprep.subr.mxu0 %v346
      %682 = vmatpush1.msra.mxu0 %v345
      %683 = vmatprep.subr.mxu0 %v348
      %684 = vmatpush1.msra.mxu0 %v347
      %685 = vmatprep.subr.mxu0 %v350
      %686 = vmatpush1.msra.mxu0 %v349
      %687 = vmatprep.subr.mxu0 %v352
      %688 = vmatpush1.msra.mxu0 %v351
      %689 = vmatprep.subr.mxu0 %v354
      %690 = vmatpush1.msra.mxu0 %v353
      %691 = vmatprep.subr.mxu0 %v356
      %692 = vmatpush1.msra.mxu0 %v355
      %693 = vmatprep.subr.mxu0 %v358
      %694 = vmatpush1.msra.mxu0 %v357
      %695 = vmatprep.subr.mxu0 %v360
      %696 = vmatpush1.msra.mxu0 %v359
      %697 = vmatprep.subr.mxu0 %v362
      %698 = vmatpush1.msra.mxu0 %v361
      %699 = vmatprep.subr.mxu0 %v364
      %700 = vmatpush1.msra.mxu0 %v363
      %701 = vmatprep.subr.mxu0 %v366
      %702 = vmatpush1.msra.mxu0 %v365
      %703 = vmatprep.subr.mxu0 %v368
      %704 = vmatpush1.msra.mxu0 %v367
      %705 = vmatprep.subr.mxu0 %v370
      %706 = vmatpush1.msra.mxu0 %v369
      %707 = vmatprep.subr.mxu0 %v372
      %708 = vmatpush1.msra.mxu0 %v371
      %709 = vmatprep.subr.mxu0 %v374
      %710 = vmatpush1.msra.mxu0 %v373
      %711 = vmatprep.subr.mxu0 %v376
      %712 = vmatpush1.msra.mxu0 %v375
      %713 = vmatprep.subr.mxu0 %v378
      %714 = vmatpush1.msra.mxu0 %v377
      %715 = vmatprep.subr.mxu0 %v380
      %716 = vmatpush1.msra.mxu0 %v379
      %717 = vmatprep.subr.mxu0 %v382
      %718 = vmatpush1.msra.mxu0 %v381
      %719 = vmatprep.subr.mxu0 %v384
      %720 = vmatpush1.msra.mxu0 %v383
      %721 = vmatprep.subr.mxu0 %v386
      %722 = vmatpush1.msra.mxu0 %v385
      %723 = vmatprep.subr.mxu0 %v388
      %724 = vmatpush1.msra.mxu0 %v387
      %725 = vmatprep.subr.mxu0 %v390
      %726 = vmatpush1.msra.mxu0 %v389
      %727 = vmatprep.subr.mxu0 %v392
      %728 = vmatpush1.msra.mxu0 %v391
      %729 = vmatprep.subr.mxu0 %v394
      %730 = vmatpush1.msra.mxu0 %v393
      %731 = vmatprep.subr.mxu0 %v396
      %732 = vmatpush1.msra.mxu0 %v395
      %733 = vmatprep.subr.mxu0 %v398
      %734 = vmatpush1.msra.mxu0 %v397
      %735 = vmatprep.subr.mxu0 %v400
      %736 = vmatpush1.msra.mxu0 %v399
      %737 = vmatprep.subr.mxu0 %v402
      %738 = vmatpush1.msra.mxu0 %v401
      %739 = vmatprep.subr.mxu0 %v404
      %740 = vmatpush1.msra.mxu0 %v403
      %741 = vmatprep.subr.mxu0 %v406
      %742 = vmatpush1.msra.mxu0 %v405
      %743 = vmatprep.mubr.f32.mxu0 %v595
      %744 = vmatmul.mubr.f32.gmra.mrb[0].mxu0 %v593
      %v745 = vpop.f32.mrb[0].mxu0
      %v746 = vadd.f32 %v642, %v745
      %v747 = vpop.f32.mrb[0].mxu0
      %v748 = vadd.f32 %v642, %v747
      %749 = vmatprep.mubr.f32.mxu0 %v601
      %750 = vmatmul.mubr.f32.gmra.mrb[0].mxu0 %v599
      %v751 = vpop.f32.mrb[0].mxu0
      %v752 = vadd.f32 %v647, %v751
      %v753 = vpop.f32.mrb[0].mxu0
      %v754 = vadd.f32 %v647, %v753
      %755 = vmatprep.mubr.f32.mxu0 %v607
      %756 = vmatmul.mubr.f32.gmra.mrb[0].mxu0 %v605
      %v757 = vpop.f32.mrb[0].mxu0
      %v758 = vadd.f32 %v652, %v757
      %v759 = vpop.f32.mrb[0].mxu0
      %v760 = vadd.f32 %v652, %v759
      %761 = vmatprep.mubr.f32.mxu0 %v613
      %762 = vmatmul.mubr.f32.gmra.mrb[0].mxu0 %v611
      %v763 = vpop.f32.mrb[0].mxu0
      %v764 = vadd.f32 %v657, %v763
      %v765 = vpop.f32.mrb[0].mxu0
      %v766 = vadd.f32 %v657, %v765
      %767 = vmatprep.mubr.f32.mxu0 %v619
      %768 = vmatmul.mubr.f32.gmra.mrb[0].mxu0 %v617
      %v769 = vpop.f32.mrb[0].mxu0
      %v770 = vadd.f32 %v662, %v769
      %v771 = vpop.f32.mrb[0].mxu0
      %v772 = vadd.f32 %v662, %v771
      %773 = vmatprep.mubr.f32.mxu0 %v625
      %774 = vmatmul.mubr.f32.gmra.mrb[0].mxu0 %v623
      %v775 = vpop.f32.mrb[0].mxu0
      %v776 = vadd.f32 %v667, %v775
      %v777 = vpop.f32.mrb[0].mxu0
      %v778 = vadd.f32 %v667, %v777
      %779 = vmatprep.mubr.f32.mxu0 %v631
      %780 = vmatmul.mubr.f32.gmra.mrb[0].mxu0 %v629
      %v781 = vpop.f32.mrb[0].mxu0
      %v782 = vadd.f32 %v672, %v781
      %v783 = vpop.f32.mrb[0].mxu0
      %v784 = vadd.f32 %v672, %v783
      %785 = vmatprep.mubr.f32.mxu0 %v637
      %786 = vmatmul.mubr.f32.gmra.mrb[0].mxu0 %v635
      %v787 = vpop.f32.mrb[0].mxu0
      %v788 = vadd.f32 %v677, %v787
      %v789 = vpop.f32.mrb[0].mxu0
      %v790 = vadd.f32 %v677, %v789
      %791 = vdwg.mxu0
      %792 = vst [vmem:[%s170] sm:$0xff] %v746
      %vm793 = vcmask 556032
      %794 = vst.msk [vmem:[%s170 + $0x8] sm:$0xff] %vm793, %v748
      %795 = vst [vmem:[%s170 + $0x10] sm:$0xff] %v752
      %796 = vst.msk [vmem:[%s170 + $0x18] sm:$0xff] %vm793, %v754
      %797 = vst [vmem:[%s170 + $0x20] sm:$0xff] %v758
      %798 = vst.msk [vmem:[%s170 + $0x28] sm:$0xff] %vm793, %v760
      %799 = vst [vmem:[%s170 + $0x30] sm:$0xff] %v764
      %800 = vst.msk [vmem:[%s170 + $0x38] sm:$0xff] %vm793, %v766
      %801 = vst [vmem:[%s170 + $0x40] sm:$0xff] %v770
      %802 = vst.msk [vmem:[%s170 + $0x48] sm:$0xff] %vm793, %v772
      %803 = vst [vmem:[%s170 + $0x50] sm:$0xff] %v776
      %804 = vst.msk [vmem:[%s170 + $0x58] sm:$0xff] %vm793, %v778
      %805 = vst [vmem:[%s170 + $0x60] sm:$0xff] %v782
      %806 = vst.msk [vmem:[%s170 + $0x68] sm:$0xff] %vm793, %v784
      %807 = vst [vmem:[%s170 + $0x70] sm:$0xff] %v788
      %808 = vst.msk [vmem:[%s170 + $0x78] sm:$0xff] %vm793, %v790
      %p809 = scmp.lt.s32.totalorder %s14, 1
      %s810 = scalar_select %p809, %s14, 1
      %s811 = smul.addr %s810, 16
      %s812 = smul.addr %s811, 8
      %s813 = scalar_lea.vmem %s3, %s812
      // Predicated region
      $region33: #{my_neural_forward.1} parent=31 // pred_check
        %p814 = pneg %p100
      $region34: #{my_neural_forward.1} parent=31 // pred_check_branch
        %816 = sbr.rel (%p814) target = $region36
      $region35: #{my_neural_forward.1} parent=31 // pred_region
        _
      $region36: #{my_neural_forward.1} parent=31 // pred_fallthru
        _
    $region32: #{my_neural_forward.1} parent=5 // pred_fallthru
      _
    %p817 = scmp.le.s32.totalorder 2, %s9
    // Predicated region
    $region37: #{my_neural_forward.1} parent=5 // pred_check
      %p818 = pneg %p817
    $region38: #{my_neural_forward.1} parent=5 // pred_check_branch
      %820 = sbr.rel (%p818) target = $region40
    $region39: #{my_neural_forward.1} parent=5 // pred_region
      %s821 = ssub.s32 %s9, 2
      // Predicated region
      $region41: #{my_neural_forward.1} parent=39 // pred_check
        %p822 = pneg %p106
      $region42: #{my_neural_forward.1} parent=39 // pred_check_branch
        %824 = sbr.rel (%p822) target = $region44
      $region43: #{my_neural_forward.1} parent=39 // pred_region
        %p825 = scmp.lt.s32.totalorder %s15, 1
        %s826 = scalar_select %p825, %s15, 1
        %s827 = smul.addr %s826, 16
        %s828 = smul.addr %s827, 8
        %s829 = scalar_lea.vmem %s3, %s828
      $region44: #{my_neural_forward.1} parent=39 // pred_fallthru
        _
    $region40: #{my_neural_forward.1} parent=5 // pred_fallthru
      _
  $region6: #{my_neural_forward.1} parent=0 // loop_footer
    %s13 = sadd.s32 1, %s9
  $region7: #{my_neural_forward.1} parent=0 // loop_footer_branch
    %8 = sbr.rel target = $region3
  $region8: #{my_neural_forward.1} parent=0 // loop_exit
    _

</llo_original>
